<compile_context>
chip_gen: v5e
topology: v5e:2x2
jax: 0.10.0
libtpu: 0.0.40
codegen_flags: <defaults>
</compile_context>

<pallas_src>
import functools

import jax
import jax.numpy as jnp
from jax.experimental import pallas as pl
from jax.experimental.pallas import tpu as pltpu


def _large_margin_loss_kernel(
    logits_ref, targets_ref, out_ref, acc_ref,
    *, gamma, aggregation, batch_size, block_rows, needs_mask
):
    i = pl.program_id(0)

    # ---- init running sums on the first tile ----
    @pl.when(i == 0)
    def _init():
        acc_ref[0] = 0.0   # sum of per-row cross entropy
        acc_ref[1] = 0.0   # sum of per-row margin terms

    logits = logits_ref[...].astype(jnp.float32)            # [TB, C] f32
    tgt = targets_ref[...]                                   # [TB, 1] int32
    tb, c = logits.shape

    # boolean target mask (no f32 one-hot materialization)
    class_ids = jax.lax.broadcasted_iota(jnp.int32, (tb, c), 1)
    tgt_mask = class_ids == tgt                               # [TB, C] bool

    # ---- cross entropy: numerically stable log-sum-exp per row ----
    row_max = jnp.max(logits, axis=1, keepdims=True)          # [TB, 1]
    lse = jnp.log(jnp.sum(jnp.exp(logits - row_max), axis=1, keepdims=True)) + row_max
    correct = jnp.sum(jnp.where(tgt_mask, logits, 0.0), axis=1, keepdims=True)  # [TB, 1]
    ce_rows = lse - correct                                   # [TB, 1]

    # ---- margin violations ----
    viol = jnp.maximum(gamma + logits - correct, 0.0)         # [TB, C]
    viol = jnp.where(tgt_mask, 0.0, viol)
    if aggregation == 'max':
        margin_rows = jnp.max(viol, axis=1, keepdims=True)    # [TB, 1]
    else:
        margin_rows = jnp.sum(viol, axis=1, keepdims=True)    # [TB, 1]

    # ---- mask out padded rows of a partial last tile ----
    if needs_mask:
        row_ids = jax.lax.broadcasted_iota(jnp.int32, (tb, 1), 0) + i * block_rows
        valid = row_ids < batch_size
        ce_rows = jnp.where(valid, ce_rows, 0.0)
        margin_rows = jnp.where(valid, margin_rows, 0.0)

    # ---- accumulate raw sums (blend/normalize hoisted to finalize) ----
    acc_ref[0] = acc_ref[0] + jnp.sum(ce_rows)
    acc_ref[1] = acc_ref[1] + jnp.sum(margin_rows)

    # ---- finalize on the last tile ----
    @pl.when(i == pl.num_programs(0) - 1)
    def _finalize():
        inv_b = 1.0 / batch_size
        out_ref[0, 0] = (0.8 * acc_ref[0] + 0.2 * acc_ref[1]) * inv_b


def simple_large_margin_loss(logits, targets, *, gamma=10.0, aggregation='max',
                             block_b=1024):
    """logits: [B, C] float (any dtype), targets: [B] int. Returns scalar f32 loss."""
    B, C = logits.shape
    targets2d = targets.astype(jnp.int32).reshape(B, 1)

    itemsize = jnp.dtype(logits.dtype).itemsize
    # sublane granularity: f32 -> 8, bf16 -> 16, int8/fp8 -> 32
    sub = {4: 8, 2: 16, 1: 32}.get(itemsize, 8)

    # Size the batch tile so the double-buffered logits stream stays well
    # under the default scoped VMEM on every generation (v5e 16 MiB is the
    # tightest): 2 * TB * C * itemsize <= ~12 MiB.
    budget = 12 * 1024 * 1024
    rows_by_vmem = max(sub, ((budget // max(1, 2 * C * itemsize)) // sub) * sub)
    tb = max(sub, (min(block_b, rows_by_vmem) // sub) * sub)
    if tb >= B:
        tb = B  # single full-extent block is always a legal tile
    num_blocks = pl.cdiv(B, tb)
    needs_mask = (B % tb) != 0

    kernel = functools.partial(
        _large_margin_loss_kernel,
        gamma=float(gamma),
        aggregation=aggregation,
        batch_size=B,
        block_rows=tb,
        needs_mask=needs_mask,
    )

    cost = pl.CostEstimate(
        flops=8 * B * C,
        transcendentals=B * C,
        bytes_accessed=B * C * itemsize + B * 4 + 4,
    )

    out = pl.pallas_call(
        kernel,
        out_shape=jax.ShapeDtypeStruct((1, 1), jnp.float32),
        grid_spec=pltpu.PrefetchScalarGridSpec(
            num_scalar_prefetch=0,
            grid=(num_blocks,),
            in_specs=[
                pl.BlockSpec((tb, C), lambda i: (i, 0)),   # logits tile (native dtype)
                pl.BlockSpec((tb, 1), lambda i: (i, 0)),   # targets tile
            ],
            out_specs=pl.BlockSpec((1, 1), lambda i: (0, 0),
                                   memory_space=pltpu.SMEM),
            scratch_shapes=[pltpu.SMEM((2,), jnp.float32)],  # [ce_sum, margin_sum]
        ),
        compiler_params=pltpu.CompilerParams(
            dimension_semantics=("arbitrary",),  # serial reduction over batch tiles
        ),
        cost_estimate=cost,
    )(logits, targets2d)
    return out[0, 0]


def _reference(logits, targets, gamma=10.0, aggregation='max'):
    # pure-JAX reference matching the PyTorch module (f32 math)
    logits = logits.astype(jnp.float32)
    B, C = logits.shape
    one_hot = jax.nn.one_hot(targets, C, dtype=jnp.float32)
    ce = jnp.mean(jax.nn.logsumexp(logits, axis=1) - jnp.sum(logits * one_hot, axis=1))
    correct = jnp.sum(logits * one_hot, axis=1, keepdims=True)
    viol = jax.nn.relu((gamma + logits - correct) * (1.0 - one_hot))
    if aggregation == 'max':
        margin = jnp.mean(jnp.max(viol, axis=1))
    else:
        margin = jnp.mean(jnp.sum(viol, axis=1))
    return 0.8 * ce + 0.2 * margin


if __name__ == "__main__":
    key = jax.random.PRNGKey(0)

    # --- case 1: f32, single tile, 'max' aggregation ---
    k1, k2, key = jax.random.split(key, 3)
    B1, C1 = 8, 16
    logits1 = jax.random.normal(k1, (B1, C1), dtype=jnp.float32) * 3.0
    targets1 = jax.random.randint(k2, (B1,), 0, C1, dtype=jnp.int32)
    out1 = jax.block_until_ready(
        simple_large_margin_loss(logits1, targets1, gamma=10.0, aggregation='max'))
    ref1 = _reference(logits1, targets1, gamma=10.0, aggregation='max')
    assert jnp.allclose(out1, ref1, rtol=1e-5, atol=1e-5), (out1, ref1)

    # --- case 2: bf16 input, multi-tile grid with a padded last tile, 'sum' ---
    k3, k4 = jax.random.split(key)
    B2, C2 = 40, 128
    logits2 = (jax.random.normal(k3, (B2, C2), dtype=jnp.float32) * 3.0).astype(jnp.bfloat16)
    targets2 = jax.random.randint(k4, (B2,), 0, C2, dtype=jnp.int32)
    out2 = jax.block_until_ready(
        simple_large_margin_loss(logits2, targets2, gamma=10.0, aggregation='sum',
                                 block_b=16))
    ref2 = _reference(logits2, targets2, gamma=10.0, aggregation='sum')
    assert jnp.allclose(out2, ref2, rtol=1e-4, atol=1e-4), (out2, ref2)

    print("KERNEL_OK")
</pallas_src>

<mosaic_0001>
module attributes {stable_mosaic.version = 11 : i64} {
  func.func @_large_margin_loss_kernel(%arg0: i32, %arg1: memref<8x16xf32, #tpu.memory_space<vmem>>, %arg2: memref<8x1xi32, #tpu.memory_space<vmem>>, %arg3: memref<1x1xf32, #tpu.memory_space<smem>>, %arg4: memref<2xf32, #tpu.memory_space<smem>>) attributes {dimension_semantics = [#tpu.dimension_semantics<arbitrary>], iteration_bounds = array<i64: 1>, scalar_prefetch = 0 : i64, scratch_operands = 1 : i64, tpu.core_type = #tpu.core_type<tc>, window_params = [{transform_indices = @transform_0, window_bounds = array<i64: 8, 16>}, {transform_indices = @transform_1, window_bounds = array<i64: 8, 1>}, {transform_indices = @transform_2, window_bounds = array<i64: 1, 1>}]} {
    %c0_i32 = arith.constant 0 : i32
    %0 = arith.cmpi eq, %arg0, %c0_i32 : i32
    %1 = arith.extui %0 : i1 to i32
    %c0_i32_0 = arith.constant 0 : i32
    %2 = arith.cmpi ne, %1, %c0_i32_0 : i32
    scf.if %2 {
      %cst_18 = arith.constant 0.000000e+00 : f32
      %c0_19 = arith.constant 0 : index
      %49 = memref.load %arg4[%c0_19] : memref<2xf32, #tpu.memory_space<smem>>
      memref.store %cst_18, %arg4[%c0_19] : memref<2xf32, #tpu.memory_space<smem>>
      %cst_20 = arith.constant 0.000000e+00 : f32
      %c1_21 = arith.constant 1 : index
      %50 = memref.load %arg4[%c1_21] : memref<2xf32, #tpu.memory_space<smem>>
      memref.store %cst_20, %arg4[%c1_21] : memref<2xf32, #tpu.memory_space<smem>>
    } else {
    }
    %c0 = arith.constant 0 : index
    %c0_1 = arith.constant 0 : index
    %3 = vector.load %arg1[%c0, %c0_1] : memref<8x16xf32, #tpu.memory_space<vmem>>, vector<8x16xf32>
    %c0_2 = arith.constant 0 : index
    %c0_3 = arith.constant 0 : index
    %4 = vector.load %arg2[%c0_2, %c0_3] : memref<8x1xi32, #tpu.memory_space<vmem>>, vector<8x1xi32>
    %5 = tpu.iota {dimensions = array<i32: 1>} : vector<8x16xi32>
    %6 = vector.broadcast %4 : vector<8x1xi32> to vector<8x16xi32>
    %7 = arith.cmpi eq, %5, %6 : vector<8x16xi32>
    %cst = arith.constant dense<0xFF800000> : vector<8xf32>
    %8 = vector.multi_reduction <maximumf>, %3, %cst [1] : vector<8x16xf32> to vector<8xf32>
    %9 = vector.shape_cast %8 : vector<8xf32> to vector<8x1xf32>
    %10 = vector.broadcast %9 : vector<8x1xf32> to vector<8x16xf32>
    %11 = arith.subf %3, %10 : vector<8x16xf32>
    %12 = math.exp %11 : vector<8x16xf32>
    %cst_4 = arith.constant dense<0.000000e+00> : vector<8xf32>
    %13 = vector.multi_reduction <add>, %12, %cst_4 [1] : vector<8x16xf32> to vector<8xf32>
    %14 = vector.shape_cast %13 : vector<8xf32> to vector<8x1xf32>
    %15 = math.log %14 : vector<8x1xf32>
    %16 = arith.addf %15, %9 : vector<8x1xf32>
    %cst_5 = arith.constant 0.000000e+00 : f32
    %17 = vector.broadcast %cst_5 : f32 to vector<8x16xf32>
    %18 = arith.select %7, %3, %17 : vector<8x16xi1>, vector<8x16xf32>
    %cst_6 = arith.constant dense<0.000000e+00> : vector<8xf32>
    %19 = vector.multi_reduction <add>, %18, %cst_6 [1] : vector<8x16xf32> to vector<8xf32>
    %20 = vector.shape_cast %19 : vector<8xf32> to vector<8x1xf32>
    %21 = arith.subf %16, %20 : vector<8x1xf32>
    %cst_7 = arith.constant 1.000000e+01 : f32
    %22 = vector.broadcast %cst_7 : f32 to vector<8x16xf32>
    %23 = arith.addf %22, %3 : vector<8x16xf32>
    %24 = vector.broadcast %20 : vector<8x1xf32> to vector<8x16xf32>
    %25 = arith.subf %23, %24 : vector<8x16xf32>
    %cst_8 = arith.constant 0.000000e+00 : f32
    %26 = vector.broadcast %cst_8 : f32 to vector<8x16xf32>
    %27 = arith.maximumf %25, %26 : vector<8x16xf32>
    %cst_9 = arith.constant 0.000000e+00 : f32
    %28 = vector.broadcast %cst_9 : f32 to vector<8x16xf32>
    %29 = arith.select %7, %28, %27 : vector<8x16xi1>, vector<8x16xf32>
    %cst_10 = arith.constant dense<0xFF800000> : vector<8xf32>
    %30 = vector.multi_reduction <maximumf>, %29, %cst_10 [1] : vector<8x16xf32> to vector<8xf32>
    %31 = vector.shape_cast %30 : vector<8xf32> to vector<8x1xf32>
    %c0_11 = arith.constant 0 : index
    %32 = memref.load %arg4[%c0_11] : memref<2xf32, #tpu.memory_space<smem>>
    %33 = vector.shape_cast %21 : vector<8x1xf32> to vector<1x8x1xf32>
    %cst_12 = arith.constant dense<0.000000e+00> : vector<1xf32>
    %34 = vector.multi_reduction <add>, %33, %cst_12 [1, 2] : vector<1x8x1xf32> to vector<1xf32>
    %35 = vector.shape_cast %34 : vector<1xf32> to vector<1x1x1xf32>
    %36 = vector.extract %35[0, 0, 0] : f32 from vector<1x1x1xf32>
    %37 = arith.addf %32, %36 : f32
    %c0_13 = arith.constant 0 : index
    %38 = memref.load %arg4[%c0_13] : memref<2xf32, #tpu.memory_space<smem>>
    memref.store %37, %arg4[%c0_13] : memref<2xf32, #tpu.memory_space<smem>>
    %c1 = arith.constant 1 : index
    %39 = memref.load %arg4[%c1] : memref<2xf32, #tpu.memory_space<smem>>
    %40 = vector.shape_cast %31 : vector<8x1xf32> to vector<1x8x1xf32>
    %cst_14 = arith.constant dense<0.000000e+00> : vector<1xf32>
    %41 = vector.multi_reduction <add>, %40, %cst_14 [1, 2] : vector<1x8x1xf32> to vector<1xf32>
    %42 = vector.shape_cast %41 : vector<1xf32> to vector<1x1x1xf32>
    %43 = vector.extract %42[0, 0, 0] : f32 from vector<1x1x1xf32>
    %44 = arith.addf %39, %43 : f32
    %c1_15 = arith.constant 1 : index
    %45 = memref.load %arg4[%c1_15] : memref<2xf32, #tpu.memory_space<smem>>
    memref.store %44, %arg4[%c1_15] : memref<2xf32, #tpu.memory_space<smem>>
    %c0_i32_16 = arith.constant 0 : i32
    %46 = arith.cmpi eq, %arg0, %c0_i32_16 : i32
    %47 = arith.extui %46 : i1 to i32
    %c0_i32_17 = arith.constant 0 : i32
    %48 = arith.cmpi ne, %47, %c0_i32_17 : i32
    scf.if %48 {
      %c0_18 = arith.constant 0 : index
      %49 = memref.load %arg4[%c0_18] : memref<2xf32, #tpu.memory_space<smem>>
      %cst_19 = arith.constant 8.000000e-01 : f32
      %50 = arith.mulf %cst_19, %49 : f32
      %c1_20 = arith.constant 1 : index
      %51 = memref.load %arg4[%c1_20] : memref<2xf32, #tpu.memory_space<smem>>
      %cst_21 = arith.constant 2.000000e-01 : f32
      %52 = arith.mulf %cst_21, %51 : f32
      %53 = arith.addf %50, %52 : f32
      %cst_22 = arith.constant 1.250000e-01 : f32
      %54 = arith.mulf %53, %cst_22 : f32
      %c0_23 = arith.constant 0 : index
      %c0_24 = arith.constant 0 : index
      %55 = memref.load %arg3[%c0_23, %c0_24] : memref<1x1xf32, #tpu.memory_space<smem>>
      memref.store %54, %arg3[%c0_23, %c0_24] : memref<1x1xf32, #tpu.memory_space<smem>>
    } else {
    }
    return
  }
  func.func @transform_0(%arg0: i32) -> (i32, i32) {
    %c0_i32 = arith.constant 0 : i32
    %c0_i32_0 = arith.constant 0 : i32
    return %arg0, %c0_i32 : i32, i32
  }
  func.func @transform_1(%arg0: i32) -> (i32, i32) {
    %c0_i32 = arith.constant 0 : i32
    %c0_i32_0 = arith.constant 0 : i32
    return %arg0, %c0_i32 : i32, i32
  }
  func.func @transform_2(%arg0: i32) -> (i32, i32) {
    %c0_i32 = arith.constant 0 : i32
    %c0_i32_0 = arith.constant 0 : i32
    %c0_i32_1 = arith.constant 0 : i32
    return %c0_i32, %c0_i32_0 : i32, i32
  }
}

</mosaic_0001>

<llo_original>
// kernel: tpu_custom_call.1
$region0: #{tpu_custom_call.1}
  #allocation0 [shape = 'u32[]', space=smem, size = 0x4, offset = 0x4, fixed_abs, tag = 'smem constant byte address 0x4 - core index']
  #allocation1 [shape = 'u32[72,128]{1,0:T(1,128)}', space=vmem, size = 0x9000, scoped, tag = 'internal scratch']
  #allocation2 [shape = 'f32[2]{0:T(128)}', space=smem, size = 0x200, scoped, tag = 'scratch operand']
  %s0 = inlined_call_operand.vmem [shape: f32[8,16], index: 0, kind: input, shape index: {}]
  %s1 = inlined_call_operand.vmem [shape: s32[8,1], index: 1, kind: input, shape index: {}]
  %s2 = inlined_call_operand.hbm [shape: f32[1,1], index: 2, kind: output, shape index: {}]
  %s3 = sld [smem:[#allocation0]]
  $region26: #{tpu_custom_call.1} parent=0
    _
  %s5 = ssub.s32 1, %s3
  %s6 = scalar_select 0, %s5, %s3
  $region1: #{tpu_custom_call.1} parent=0
    #allocation3 [shape = 'u8[512]{0}', space=smem, size = 0x200, scoped, tag = 'output window, operand 0, single buffered']
    #allocation4 [shape = 's32[1]{0}', space=sflag, size = 0x4, scoped, tag = 'scoped memory for tpu_custom_call.1']
    %7 = vsyncpa [#allocation4], 0
    // Predicated region
    $region2: #{tpu_custom_call.1} parent=1 // pred_check
      _
    $region3: #{tpu_custom_call.1} parent=1 // pred_check_branch
      %9 = sbr.rel (0) target = $region5
    $region4: #{tpu_custom_call.1} parent=1 // pred_region
      _
    $region5: #{tpu_custom_call.1} parent=1 // pred_fallthru
      _
    // Predicated region
    $region6: #{tpu_custom_call.1} parent=1 // pred_check
      _
    $region7: #{tpu_custom_call.1} parent=1 // pred_check_branch
      %11 = sbr.rel (0) target = $region9
    $region8: #{tpu_custom_call.1} parent=1 // pred_region
      _
    $region9: #{tpu_custom_call.1} parent=1 // pred_fallthru
      _
    %p12 = scmp.eq.s32.totalorder 0, 0
    // Predicated region
    $region10: #{tpu_custom_call.1} parent=1 // pred_check
      %p13 = pneg %p12
    $region11: #{tpu_custom_call.1} parent=1 // pred_check_branch
      %15 = sbr.rel (%p13) target = $region13
    $region12: #{tpu_custom_call.1} parent=1 // pred_region
      %s16 = scalar_lea.smem [#allocation2], 0
      %17 = sst [smem:[%s16]] 0.0
      %s18 = scalar_lea.smem [#allocation2], 1
      %19 = sst [smem:[%s18]] 0.0
    $region13: #{tpu_custom_call.1} parent=1 // pred_fallthru
      _
    %v20 = vld [vmem:[%s0] sm:$0xff]
    %v21 = vld [vmem:[%s1] sm:$0xff]
    %v22 = vlaneseq
    %v23 = vand.u32 %v22, 127
    %24 = vset.pattern.permute.xlu0 0
    %25 = vperm.xlu0 %24, %v21
    %v26 = vpop.permute.xlu0 %25
    %vm27 = vcmp.eq.s32.totalorder %v23, %v26
    %vm28 = vcmask 130048
    %v29 = vsel %vm28, %v20, -inf
    %30 = vmax.xlane.f32.xlu0 %v29
    %v31 = vpop.xlane.xlu0 %30
    %v32 = vsub.f32 %v20, %v31
    %v33 = vmul.f32 %v32, 1.442695
    %v34 = vpow.pop %v33
    %v35 = vsel %vm28, %v34, 0.0
    %36 = vadd.xlane.f32.xlu0 %v35
    %v37 = vpop.xlane.xlu0 %36
    %v38 = vlog2.pop %v37
    %v39 = vmul.f32 %v38, 0.6931472
    %v40 = vadd.f32 %v39, %v31
    %v41 = vsel %vm27, %v20, 0.0
    %v42 = vsel %vm28, %v41, 0.0
    %43 = vadd.xlane.f32.xlu0 %v42
    %v44 = vpop.xlane.xlu0 %43
    %v45 = vsub.f32 %v40, %v44
    %v46 = vadd.f32 %v20, 10.0
    %v47 = vsub.f32 %v46, %v44
    %v48 = vmax.f32 %v47, 0.0
    %v49 = vsel %vm27, 0.0, %v48
    %v50 = vsel %vm28, %v49, -inf
    %51 = vmax.xlane.f32.xlu0 %v50
    %v52 = vpop.xlane.xlu0 %51
    %s53 = sld [smem:[#allocation2]]
    %vm54 = vcmask 7168
    %v55 = vsel %vm54, %v45, 0.0
    %56 = vadd.xlane.f32.xlu0 %v55
    %v57 = vpop.xlane.xlu0 %56
    %v58 = vrot.slane %v57, 4
    %v59 = vadd.f32 %v57, %v58
    %v60 = vrot.slane %v59, 2
    %v61 = vadd.f32 %v59, %v60
    %v62 = vrot.slane %v61, 1
    %v63 = vadd.f32 %v61, %v62
    %s64 = vtos %v63
    %s65 = sadd.f32 %s53, %s64
    %s66 = scalar_lea.smem [#allocation2], 0
    %67 = sst [smem:[%s66]] %s65
    %s68 = sld [smem:[#allocation2 + $0x1]]
    %v69 = vsel %vm54, %v52, 0.0
    %70 = vadd.xlane.f32.xlu0 %v69
    %v71 = vpop.xlane.xlu0 %70
    %v72 = vrot.slane %v71, 4
    %v73 = vadd.f32 %v71, %v72
    %v74 = vrot.slane %v73, 2
    %v75 = vadd.f32 %v73, %v74
    %v76 = vrot.slane %v75, 1
    %v77 = vadd.f32 %v75, %v76
    %s78 = vtos %v77
    %s79 = sadd.f32 %s68, %s78
    %s80 = scalar_lea.smem [#allocation2], 1
    %81 = sst [smem:[%s80]] %s79
    // Predicated region
    $region14: #{tpu_custom_call.1} parent=1 // pred_check
      %p82 = pneg %p12
    $region15: #{tpu_custom_call.1} parent=1 // pred_check_branch
      %84 = sbr.rel (%p82) target = $region17
    $region16: #{tpu_custom_call.1} parent=1 // pred_region
      %s85 = sld [smem:[#allocation2]]
      %s86 = smul.f32 %s85, 0.8
      %s87 = sld [smem:[#allocation2 + $0x1]]
      %s88 = smul.f32 %s87, 0.2
      %s89 = sadd.f32 %s86, %s88
      %s90 = smul.f32 %s89, 0.125
      %s91 = scalar_lea.smem [#allocation3], 0
      %92 = sst [smem:[%s91]] %s90
    $region17: #{tpu_custom_call.1} parent=1 // pred_fallthru
      _
    // Predicated region
    $region18: #{tpu_custom_call.1} parent=1 // pred_check
      _
    $region19: #{tpu_custom_call.1} parent=1 // pred_check_branch
      %94 = sbr.rel (0) target = $region21
    $region20: #{tpu_custom_call.1} parent=1 // pred_region
      %96 = vsyncadd [#allocation4], 0
      %s98 = sshll.u32 %s2, 4
      %s99 = int_to_ptr.hbm [resolvable:$true] %s98
      %101 = dma.smem_to_hbm [#allocation3], 16, %s99, [#allocation4]
    $region21: #{tpu_custom_call.1} parent=1 // pred_fallthru
      _
    // Predicated region
    $region22: #{tpu_custom_call.1} parent=1 // pred_check
      _
    $region23: #{tpu_custom_call.1} parent=1 // pred_check_branch
      %103 = sbr.rel (0) target = $region25
    $region24: #{tpu_custom_call.1} parent=1 // pred_region
      %105 = dma.done [#allocation4], 16
    $region25: #{tpu_custom_call.1} parent=1 // pred_fallthru
      _
    %106 = sfence
    %107 = vsyncpa [#allocation4], 1

</llo_original>
